<compile_context>
chip_gen: v7x
topology: tpu7x:2x2x1
jax: 0.10.0
libtpu: 0.0.40
codegen_flags: <defaults>
</compile_context>

<pallas_src>
import math

import jax
import jax.numpy as jnp
from jax.experimental import pallas as pl
from jax.experimental.pallas import tpu as pltpu


def _round_up(v: int, m: int) -> int:
    return (v + m - 1) // m * m


def _choose_tile(n_p: int, preferred: int) -> int:
    """Largest multiple of 128 that is <= preferred and divides n_p."""
    t = min(preferred, n_p)
    t = max(128, t - (t % 128))
    while n_p % t != 0:
        t -= 128
    return t


def _pad_cast(a, shape, dtype):
    """Cast to dtype and zero-pad to `shape`; avoids a copy when already OK."""
    a = a.astype(dtype)
    if a.shape == tuple(shape):
        return a
    buf = jnp.zeros(shape, dtype)
    return buf.at[tuple(slice(0, s) for s in a.shape)].set(a)


def _gin_kernel(adj_ref, x_ref, w_ref, b_ref, out_ref, rep_ref, acc_ref):
    k = pl.program_id(1)                       # reduction axis (adj columns)

    @pl.when(k == 0)
    def _init():
        acc_ref[...] = jnp.zeros_like(acc_ref)

    # acc += (adj + eps*I)[i, k] @ x[k]   (epsilon already folded into adj's
    # diagonal in the wrapper) — bf16 MXU matmul, f32 accumulation.
    acc_ref[...] += jnp.dot(adj_ref[...], x_ref[...],
                            preferred_element_type=jnp.float32)

    # Finalize: write rep, apply the linear layer (+ bias) in f32, write out.
    @pl.when(k == pl.num_programs(1) - 1)
    def _fin():
        rep = acc_ref[...]
        rep_ref[...] = rep.astype(rep_ref.dtype)
        out = jnp.dot(rep, w_ref[...], preferred_element_type=jnp.float32)
        out_ref[...] = (out + b_ref[...]).astype(out_ref.dtype)


def graph_isomorphism_forward(x, adj, weight, epsilon, bias=None, *,
                              row_tile=256, k_tile=512,
                              stream_dtype=jnp.bfloat16):
    """GIN layer forward.

    x: [N, Fin], adj: [N, N] dense (0/1), weight: [Fin, Fout], epsilon: scalar,
    bias: [Fout] or None.  Returns (out [N, Fout], rep [N, Fin])."""
    n, fin = x.shape
    fin_w, fout = weight.shape
    assert fin == fin_w and adj.shape == (n, n)

    out_dtype = x.dtype
    n_p = _round_up(max(n, 1), 128)            # padded node count
    din = _round_up(fin, 128)                  # lane-dense feature dims
    dout = _round_up(fout, 128)

    # Tiles: big contraction tile (tk) for the streamed adj; row tile (tm)
    # kept so there are >= 2 row tiles when possible (v7x dual TensorCore).
    tm = _choose_tile(n_p, row_tile)
    if n_p // tm < 2 and n_p >= 256:
        tm = _choose_tile(n_p, max(128, tm // 2))
    tk = _choose_tile(n_p, k_tile)

    # Fold epsilon into the adjacency diagonal:  rep = (adj + eps*I) @ x.
    # The add is fused by XLA into the cast/pad copy of adj we build anyway.
    eps = jnp.asarray(epsilon, jnp.float32).reshape(())
    adj_eps = adj.astype(jnp.float32) + eps * jnp.eye(n, dtype=jnp.float32)
    adj_s = _pad_cast(adj_eps, (n_p, n_p), stream_dtype)   # streamed, bf16
    x_s = _pad_cast(x, (n_p, din), stream_dtype)           # streamed, bf16
    w_s = _pad_cast(weight, (din, dout), jnp.float32)      # resident, f32
    b = bias if bias is not None else jnp.zeros((fout,), jnp.float32)
    b_s = _pad_cast(jnp.reshape(b, (1, -1)), (1, dout), jnp.float32)

    grid = (n_p // tm, n_p // tk)

    sb = jnp.dtype(stream_dtype).itemsize
    ob = jnp.dtype(out_dtype).itemsize
    # Advisory cost estimate for XLA scheduling around the custom call.
    flops = 2 * n_p * n_p * din + 2 * n_p * din * dout
    bytes_accessed = (n_p * n_p * sb                      # adj, read once
                      + (n_p // tm) * n_p * din * sb      # x, re-read per stripe
                      + din * dout * 4 + dout * 4         # weight + bias
                      + n_p * dout * ob + n_p * din * ob) # out + rep writes
    cost = pl.CostEstimate(flops=int(flops), transcendentals=0,
                           bytes_accessed=int(bytes_accessed))

    # Explicit VMEM limit so large tiles also compile on v5e (16 MiB default).
    vmem_need = (2 * tm * tk * sb + 2 * tk * din * sb      # adj, x (dbl-buffered)
                 + 2 * din * dout * 4 + 2 * dout * 4       # weight, bias
                 + 2 * tm * dout * ob + 2 * tm * din * ob  # out, rep
                 + tm * din * 4)                           # f32 accumulator
    vmem_limit = int(min(64 * 2**20, max(32 * 2**20, vmem_need * 5 // 4)))

    out_p, rep_p = pl.pallas_call(
        _gin_kernel,
        out_shape=(
            jax.ShapeDtypeStruct((n_p, dout), out_dtype),   # out
            jax.ShapeDtypeStruct((n_p, din), out_dtype),    # rep
        ),
        grid=grid,
        in_specs=[
            pl.BlockSpec((tm, tk), lambda i, k: (i, k)),      # adj + eps*I
            pl.BlockSpec((tk, din), lambda i, k: (k, 0)),     # x (k-th stripe)
            pl.BlockSpec((din, dout), lambda i, k: (0, 0)),   # weight (resident)
            pl.BlockSpec((1, dout), lambda i, k: (0, 0)),     # bias   (resident)
        ],
        out_specs=(
            pl.BlockSpec((tm, dout), lambda i, k: (i, 0)),    # out
            pl.BlockSpec((tm, din), lambda i, k: (i, 0)),     # rep
        ),
        scratch_shapes=[pltpu.VMEM((tm, din), jnp.float32)],  # f32 accumulator
        compiler_params=pltpu.CompilerParams(
            dimension_semantics=("parallel", "arbitrary"),
            vmem_limit_bytes=vmem_limit),
        cost_estimate=cost,
    )(adj_s, x_s, w_s, b_s)

    return out_p[:n, :fout], rep_p[:n, :fin]


def _gin_ref(x, adj, weight, epsilon, bias=None):
    """Pure-JAX f32 reference mirroring the PyTorch module."""
    xf = x.astype(jnp.float32)
    rep = adj.astype(jnp.float32) @ xf + jnp.float32(epsilon) * xf
    out = rep @ weight.astype(jnp.float32)
    if bias is not None:
        out = out + bias.astype(jnp.float32)
    return out.astype(x.dtype), rep.astype(x.dtype)


if __name__ == "__main__":
    key = jax.random.PRNGKey(0)
    k1, k2, k3, k4 = jax.random.split(key, 4)

    # Small graph: 300 nodes (pads to 384 -> 3 row tiles), 64 -> 32 features.
    n_nodes, in_features, out_features = 300, 64, 32
    x = jax.random.normal(k1, (n_nodes, in_features), dtype=jnp.float32)
    adj = (jax.random.uniform(k2, (n_nodes, n_nodes)) < 0.1).astype(jnp.float32)
    stdv = 1.0 / math.sqrt(out_features)
    weight = jax.random.uniform(k3, (in_features, out_features), jnp.float32,
                                minval=-stdv, maxval=stdv)
    bias = jax.random.uniform(k4, (out_features,), jnp.float32,
                              minval=-stdv, maxval=stdv)
    epsilon = jnp.float32(1.0)   # reset_parameters() fills epsilon with 1

    out, rep = graph_isomorphism_forward(x, adj, weight, epsilon, bias)
    out, rep = jax.block_until_ready((out, rep))

    out_ref, rep_ref = _gin_ref(x, adj, weight, epsilon, bias)

    # adj/x are streamed as bf16 (adj 0/1 is exact; x loses ~3 decimal digits),
    # so compare against the pure-f32 reference at a bf16-appropriate tolerance.
    ok = (bool(jnp.allclose(out, out_ref, atol=5e-2, rtol=5e-2)) and
          bool(jnp.allclose(rep, rep_ref, atol=5e-2, rtol=5e-2)))
    if ok:
        print("KERNEL_OK")
    else:
        print("MISMATCH: out max err",
              float(jnp.max(jnp.abs(out - out_ref))),
              "rep max err",
              float(jnp.max(jnp.abs(rep - rep_ref))))
</pallas_src>

<mosaic_0001>
module attributes {stable_mosaic.version = 11 : i64} {
  func.func @_gin_kernel(%arg0: i32, %arg1: i32, %arg2: memref<128x384xbf16, #tpu.memory_space<vmem>>, %arg3: memref<384x128xbf16, #tpu.memory_space<vmem>>, %arg4: memref<128x128xf32, #tpu.memory_space<vmem>>, %arg5: memref<1x128xf32, #tpu.memory_space<vmem>>, %arg6: memref<128x128xf32, #tpu.memory_space<vmem>>, %arg7: memref<128x128xf32, #tpu.memory_space<vmem>>, %arg8: memref<128x128xf32, #tpu.memory_space<vmem>>) attributes {dimension_semantics = [#tpu.dimension_semantics<parallel>, #tpu.dimension_semantics<arbitrary>], iteration_bounds = array<i64: 3, 1>, scalar_prefetch = 0 : i64, scratch_operands = 1 : i64, tpu.core_type = #tpu.core_type<tc>, window_params = [{transform_indices = @transform_0, window_bounds = array<i64: 128, 384>}, {transform_indices = @transform_1, window_bounds = array<i64: 384, 128>}, {pipeline_mode = #tpu.pipeline_mode<synchronous>, transform_indices = @transform_2, window_bounds = array<i64: 128, 128>}, {pipeline_mode = #tpu.pipeline_mode<synchronous>, transform_indices = @transform_3, window_bounds = array<i64: 1, 128>}, {transform_indices = @transform_4, window_bounds = array<i64: 128, 128>}, {transform_indices = @transform_5, window_bounds = array<i64: 128, 128>}]} {
    %c0_i32 = arith.constant 0 : i32
    %0 = arith.cmpi eq, %arg1, %c0_i32 : i32
    %1 = arith.extui %0 : i1 to i32
    %c0_i32_0 = arith.constant 0 : i32
    %2 = arith.cmpi ne, %1, %c0_i32_0 : i32
    scf.if %2 {
      %cst_10 = arith.constant 0.000000e+00 : f32
      %12 = vector.broadcast %cst_10 : f32 to vector<128x128xf32>
      %c0_11 = arith.constant 0 : index
      %c0_12 = arith.constant 0 : index
      %13 = vector.load %arg8[%c0_11, %c0_12] : memref<128x128xf32, #tpu.memory_space<vmem>>, vector<128x128xf32>
      tpu.vector_store %arg8[%c0_11, %c0_12], %12 {strides = array<i32>} : memref<128x128xf32, #tpu.memory_space<vmem>>, vector<128x128xf32>,
    } else {
    }
    %c0 = arith.constant 0 : index
    %c0_1 = arith.constant 0 : index
    %3 = vector.load %arg8[%c0, %c0_1] : memref<128x128xf32, #tpu.memory_space<vmem>>, vector<128x128xf32>
    %c0_2 = arith.constant 0 : index
    %c0_3 = arith.constant 0 : index
    %4 = vector.load %arg2[%c0_2, %c0_3] : memref<128x384xbf16, #tpu.memory_space<vmem>>, vector<128x384xbf16>
    %c0_4 = arith.constant 0 : index
    %c0_5 = arith.constant 0 : index
    %5 = vector.load %arg3[%c0_4, %c0_5] : memref<384x128xbf16, #tpu.memory_space<vmem>>, vector<384x128xbf16>
    %cst = arith.constant dense<0.000000e+00> : vector<128x128xf32>
    %6 = tpu.matmul %4, %5, %cst {dimension_numbers = #tpu.dot_dimension_numbers<[1], [0], [0], [1], [0, 0, 1, 1], [], []>} : vector<128x384xbf16>, vector<384x128xbf16>, vector<128x128xf32> -> vector<128x128xf32>
    %7 = arith.addf %3, %6 : vector<128x128xf32>
    %c0_6 = arith.constant 0 : index
    %c0_7 = arith.constant 0 : index
    %8 = vector.load %arg8[%c0_6, %c0_7] : memref<128x128xf32, #tpu.memory_space<vmem>>, vector<128x128xf32>
    tpu.vector_store %arg8[%c0_6, %c0_7], %7 {strides = array<i32>} : memref<128x128xf32, #tpu.memory_space<vmem>>, vector<128x128xf32>,
    %c0_i32_8 = arith.constant 0 : i32
    %9 = arith.cmpi eq, %arg1, %c0_i32_8 : i32
    %10 = arith.extui %9 : i1 to i32
    %c0_i32_9 = arith.constant 0 : i32
    %11 = arith.cmpi ne, %10, %c0_i32_9 : i32
    scf.if %11 {
      %c0_10 = arith.constant 0 : index
      %c0_11 = arith.constant 0 : index
      %12 = vector.load %arg8[%c0_10, %c0_11] : memref<128x128xf32, #tpu.memory_space<vmem>>, vector<128x128xf32>
      %c0_12 = arith.constant 0 : index
      %c0_13 = arith.constant 0 : index
      %13 = vector.load %arg7[%c0_12, %c0_13] : memref<128x128xf32, #tpu.memory_space<vmem>>, vector<128x128xf32>
      tpu.vector_store %arg7[%c0_12, %c0_13], %12 {strides = array<i32>} : memref<128x128xf32, #tpu.memory_space<vmem>>, vector<128x128xf32>,
      %c0_14 = arith.constant 0 : index
      %c0_15 = arith.constant 0 : index
      %14 = vector.load %arg4[%c0_14, %c0_15] : memref<128x128xf32, #tpu.memory_space<vmem>>, vector<128x128xf32>
      %cst_16 = arith.constant dense<0.000000e+00> : vector<128x128xf32>
      %15 = tpu.matmul %12, %14, %cst_16 {dimension_numbers = #tpu.dot_dimension_numbers<[1], [0], [0], [1], [0, 0, 1, 1], [], []>} : vector<128x128xf32>, vector<128x128xf32>, vector<128x128xf32> -> vector<128x128xf32>
      %c0_17 = arith.constant 0 : index
      %c0_18 = arith.constant 0 : index
      %16 = vector.load %arg5[%c0_17, %c0_18] : memref<1x128xf32, #tpu.memory_space<vmem>>, vector<1x128xf32>
      %17 = vector.broadcast %16 : vector<1x128xf32> to vector<128x128xf32>
      %18 = arith.addf %15, %17 : vector<128x128xf32>
      %c0_19 = arith.constant 0 : index
      %c0_20 = arith.constant 0 : index
      %19 = vector.load %arg6[%c0_19, %c0_20] : memref<128x128xf32, #tpu.memory_space<vmem>>, vector<128x128xf32>
      tpu.vector_store %arg6[%c0_19, %c0_20], %18 {strides = array<i32>} : memref<128x128xf32, #tpu.memory_space<vmem>>, vector<128x128xf32>,
    } else {
    }
    return
  }
  func.func @transform_0(%arg0: i32, %arg1: i32) -> (i32, i32) {
    %c0_i32 = arith.constant 0 : i32
    return %arg0, %arg1 : i32, i32
  }
  func.func @transform_1(%arg0: i32, %arg1: i32) -> (i32, i32) {
    %c0_i32 = arith.constant 0 : i32
    %c0_i32_0 = arith.constant 0 : i32
    return %arg1, %c0_i32 : i32, i32
  }
  func.func @transform_2(%arg0: i32, %arg1: i32) -> (i32, i32) {
    %c0_i32 = arith.constant 0 : i32
    %c0_i32_0 = arith.constant 0 : i32
    %c0_i32_1 = arith.constant 0 : i32
    return %c0_i32, %c0_i32_0 : i32, i32
  }
  func.func @transform_3(%arg0: i32, %arg1: i32) -> (i32, i32) {
    %c0_i32 = arith.constant 0 : i32
    %c0_i32_0 = arith.constant 0 : i32
    %c0_i32_1 = arith.constant 0 : i32
    return %c0_i32, %c0_i32_0 : i32, i32
  }
  func.func @transform_4(%arg0: i32, %arg1: i32) -> (i32, i32) {
    %c0_i32 = arith.constant 0 : i32
    %c0_i32_0 = arith.constant 0 : i32
    return %arg0, %c0_i32 : i32, i32
  }
  func.func @transform_5(%arg0: i32, %arg1: i32) -> (i32, i32) {
    %c0_i32 = arith.constant 0 : i32
    %c0_i32_0 = arith.constant 0 : i32
    return %arg0, %c0_i32 : i32, i32
  }
}

</mosaic_0001>

<llo_original>
// kernel: tpu_custom_call.1
$region0: #{tpu_custom_call.1}
  #allocation0 [shape = 'u32[]', space=smem, size = 0x4, offset = 0x4, fixed_abs, tag = 'smem constant byte address 0x4 - core index']
  #allocation1 [shape = 'u32[144,128]{1,0:T(1,128)}', space=vmem, size = 0x12000, scoped, tag = 'internal scratch']
  #allocation2 [shape = 'f32[128,128]{1,0:T(8,128)}', space=vmem, size = 0x10000, scoped, tag = 'scratch operand']
  %s0 = inlined_call_operand.hbm [shape: bf16[384,384], index: 0, kind: input, shape index: {}]
  %s1 = inlined_call_operand.hbm [shape: bf16[384,128], index: 1, kind: input, shape index: {}]
  %s2 = inlined_call_operand.hbm [shape: f32[128,128], index: 2, kind: input, shape index: {}]
  %s3 = inlined_call_operand.vmem [shape: f32[1,128], index: 3, kind: input, shape index: {}]
  %s4 = inlined_call_operand.hbm [shape: f32[384,128], index: 4, kind: output, shape index: {0}]
  %s5 = inlined_call_operand.hbm [shape: f32[384,128], index: 5, kind: output, shape index: {1}]
  %6 = xla_tuple %s4, %s5
  %s7 = sld [smem:[#allocation0]]
  $region77: #{tpu_custom_call.1} parent=0
    _
  %s9 = ssub.s32 1, %s7
  %s10 = scalar_select 0, %s9, %s7
  $region1: #{tpu_custom_call.1} parent=0
    #allocation3 [shape = 'u8[196608]{0}', space=vmem, size = 0x30000, scoped, tag = 'input window, operand 0']
    #allocation4 [shape = 's32[2]{0}', space=sflag, size = 0x8, scoped, tag = 'scoped memory for tpu_custom_call.1']
    #allocation5 [shape = 's32[2]{0}', space=sflag, size = 0x8, scoped, tag = 'scoped memory for tpu_custom_call.1']
    #allocation6 [shape = 'u8[98304]{0}', space=vmem, size = 0x18000, scoped, tag = 'input window, operand 1, single buffered']
    #allocation7 [shape = 's32[1]{0}', space=sflag, size = 0x4, scoped, tag = 'scoped memory for tpu_custom_call.1']
    #allocation8 [shape = 'u8[65536]{0}', space=vmem, size = 0x10000, scoped, tag = 'input window, operand 2, single buffered']
    #allocation9 [shape = 'u8[131072]{0}', space=vmem, size = 0x20000, scoped, tag = 'output window, operand 0']
    #allocation10 [shape = 'u8[131072]{0}', space=vmem, size = 0x20000, scoped, tag = 'output window, operand 1']
    #allocation11 [shape = 's32[2]{0}', space=sflag, size = 0x8, scoped, tag = 'scoped memory for tpu_custom_call.1']
    %11 = vsyncpa [#allocation4], 0
    %s12 = scalar_lea.sflag [#allocation4], 1
    %13 = vsyncpa %s12, 0
    %14 = vsyncpa [#allocation7], 0
    %15 = vsyncpa [#allocation5], 0
    %s16 = scalar_lea.sflag [#allocation5], 1
    %17 = vsyncpa %s16, 0
    %18 = vsyncpa [#allocation11], 0
    %s19 = scalar_lea.sflag [#allocation11], 1
    %20 = vsyncpa %s19, 0
    loop: start=0, step=1, limit=5
    $region2: #{tpu_custom_call.1} parent=1 // loop_pre_header
      _
    $region3: #{tpu_custom_call.1} parent=1 // loop_header
      %s22 = sphi 0, %s26
      %p23 = scmp.ge.s32.totalorder %s22, 5
      %s29 = sphi 0, %s41
      %s30 = sphi 0, %s37
      %s31 = sphi 0, %s29
      %s32 = sphi 0, %s30
      %s33 = sphi 0, %s31
      %s34 = sphi 0, %s32
      %s46 = sphi 0, %s48
      %s49 = sphi 0, %s46
      %s50 = sphi 0, %s49
      %s66 = sphi 0, %s50
      %s72 = sphi 0, %s74
      %s75 = sphi 0, %s72
      %s76 = sphi 0, %s75
      %s92 = sphi 0, %s76
      %s96 = sphi 0, %s96
      %s98 = sphi 0, %s96
      %s99 = sphi 0, %s98
      %s113 = sphi 0, %s99
      %s117 = sphi 0, %s117
      %s119 = sphi 0, %s117
      %s120 = sphi 0, %s119
      %s134 = sphi 0, %s120
      %s140 = sphi 0, %s142
      %s143 = sphi 0, %s140
      %s144 = sphi 0, %s143
      %s160 = sphi 0, %s144
      %s166 = sphi 0, %s168
      %s169 = sphi 0, %s166
      %s170 = sphi 0, %s169
      %s186 = sphi 0, %s170
    $region4: #{tpu_custom_call.1} parent=1 // loop_header_branch
      %25 = sbr.rel (%p23) target = $region8
    $region5: #{tpu_custom_call.1} parent=1 // loop_body
      %s27 = ssub.s32 %s22, 1
      %s28 = ssub.s32 %s22, 2
      %s35 = sadd.s32 1, %s30
      %p36 = scmp.ge.s32.totalorder %s35, 1
      %s37 = scalar_select %p36, 0, %s35
      %s38 = sadd.s32 1, %s29
      %s39 = scalar_select %p36, %s38, %s29
      %p40 = scmp.ge.s32.totalorder %s39, 3
      %s41 = scalar_select %p40, 0, %s39
      %s42 = ssub.s32 %s29, %s41
      %s43 = ssub.s32 %s30, %s37
      %s44 = sor.u32 %s42, %s43
      %p45 = scmp.eq.s32.totalorder %s44, 0
      %s47 = sadd.s32 %s46, 1
      %s48 = scalar_select %p45, %s46, %s47
      %p51 = pneg %p45
      %p52 = scmp.eq.s32.totalorder %s22, 2
      %p53 = por %p51, %p52
      %p54 = scmp.ne.s32.totalorder %s46, %s49
      %p55 = scmp.eq.s32.totalorder %s22, 0
      %p56 = por %p54, %p55
      %p57 = scmp.ne.s32.totalorder %s46, %s49
      %p58 = scmp.eq.s32.totalorder %s27, 2
      %p59 = por %p57, %p58
      %p60 = scmp.ne.s32.totalorder %s49, %s50
      %p61 = scmp.eq.s32.totalorder %s27, 0
      %p62 = por %p60, %p61
      %p63 = scmp.ne.s32.totalorder %s49, %s50
      %p64 = scmp.eq.s32.totalorder %s28, 2
      %p65 = por %p63, %p64
      %p67 = scmp.ne.s32.totalorder %s50, %s66
      %p68 = scmp.eq.s32.totalorder %s28, 0
      %p69 = por %p67, %p68
      %s70 = ssub.s32 %s30, %s37
      %p71 = scmp.eq.s32.totalorder %s70, 0
      %s73 = sadd.s32 %s72, 1
      %s74 = scalar_select %p71, %s72, %s73
      %p77 = pneg %p71
      %p78 = scmp.eq.s32.totalorder %s22, 2
      %p79 = por %p77, %p78
      %p80 = scmp.ne.s32.totalorder %s72, %s75
      %p81 = scmp.eq.s32.totalorder %s22, 0
      %p82 = por %p80, %p81
      %p83 = scmp.ne.s32.totalorder %s72, %s75
      %p84 = scmp.eq.s32.totalorder %s27, 2
      %p85 = por %p83, %p84
      %p86 = scmp.ne.s32.totalorder %s75, %s76
      %p87 = scmp.eq.s32.totalorder %s27, 0
      %p88 = por %p86, %p87
      %p89 = scmp.ne.s32.totalorder %s75, %s76
      %p90 = scmp.eq.s32.totalorder %s28, 2
      %p91 = por %p89, %p90
      %p93 = scmp.ne.s32.totalorder %s76, %s92
      %p94 = scmp.eq.s32.totalorder %s28, 0
      %p95 = por %p93, %p94
      %s97 = sadd.s32 %s96, 1
      %p100 = scmp.eq.s32.totalorder %s22, 2
      %p101 = scmp.ne.s32.totalorder %s96, %s98
      %p102 = scmp.eq.s32.totalorder %s22, 0
      %p103 = por %p101, %p102
      %p104 = scmp.ne.s32.totalorder %s96, %s98
      %p105 = scmp.eq.s32.totalorder %s27, 2
      %p106 = por %p104, %p105
      %p107 = scmp.ne.s32.totalorder %s98, %s99
      %p108 = scmp.eq.s32.totalorder %s27, 0
      %p109 = por %p107, %p108
      %p110 = scmp.ne.s32.totalorder %s98, %s99
      %p111 = scmp.eq.s32.totalorder %s28, 2
      %p112 = por %p110, %p111
      %p114 = scmp.ne.s32.totalorder %s99, %s113
      %p115 = scmp.eq.s32.totalorder %s28, 0
      %p116 = por %p114, %p115
      %s118 = sadd.s32 %s117, 1
      %p121 = scmp.eq.s32.totalorder %s22, 2
      %p122 = scmp.ne.s32.totalorder %s117, %s119
      %p123 = scmp.eq.s32.totalorder %s22, 0
      %p124 = por %p122, %p123
      %p125 = scmp.ne.s32.totalorder %s117, %s119
      %p126 = scmp.eq.s32.totalorder %s27, 2
      %p127 = por %p125, %p126
      %p128 = scmp.ne.s32.totalorder %s119, %s120
      %p129 = scmp.eq.s32.totalorder %s27, 0
      %p130 = por %p128, %p129
      %p131 = scmp.ne.s32.totalorder %s119, %s120
      %p132 = scmp.eq.s32.totalorder %s28, 2
      %p133 = por %p131, %p132
      %p135 = scmp.ne.s32.totalorder %s120, %s134
      %p136 = scmp.eq.s32.totalorder %s28, 0
      %p137 = por %p135, %p136
      %s138 = ssub.s32 %s29, %s41
      %p139 = scmp.eq.s32.totalorder %s138, 0
      %s141 = sadd.s32 %s140, 1
      %s142 = scalar_select %p139, %s140, %s141
      %p145 = pneg %p139
      %p146 = scmp.eq.s32.totalorder %s22, 2
      %p147 = por %p145, %p146
      %p148 = scmp.ne.s32.totalorder %s140, %s143
      %p149 = scmp.eq.s32.totalorder %s22, 0
      %p150 = por %p148, %p149
      %p151 = scmp.ne.s32.totalorder %s140, %s143
      %p152 = scmp.eq.s32.totalorder %s27, 2
      %p153 = por %p151, %p152
      %p154 = scmp.ne.s32.totalorder %s143, %s144
      %p155 = scmp.eq.s32.totalorder %s27, 0
      %p156 = por %p154, %p155
      %p157 = scmp.ne.s32.totalorder %s143, %s144
      %p158 = scmp.eq.s32.totalorder %s28, 2
      %p159 = por %p157, %p158
      %p161 = scmp.ne.s32.totalorder %s144, %s160
      %p162 = scmp.eq.s32.totalorder %s28, 0
      %p163 = por %p161, %p162
      %s164 = ssub.s32 %s29, %s41
      %p165 = scmp.eq.s32.totalorder %s164, 0
      %s167 = sadd.s32 %s166, 1
      %s168 = scalar_select %p165, %s166, %s167
      %p171 = pneg %p165
      %p172 = scmp.eq.s32.totalorder %s22, 2
      %p173 = por %p171, %p172
      %p174 = scmp.ne.s32.totalorder %s166, %s169
      %p175 = scmp.eq.s32.totalorder %s22, 0
      %p176 = por %p174, %p175
      %p177 = scmp.ne.s32.totalorder %s166, %s169
      %p178 = scmp.eq.s32.totalorder %s27, 2
      %p179 = por %p177, %p178
      %p180 = scmp.ne.s32.totalorder %s169, %s170
      %p181 = scmp.eq.s32.totalorder %s27, 0
      %p182 = por %p180, %p181
      %p183 = scmp.ne.s32.totalorder %s169, %s170
      %p184 = scmp.eq.s32.totalorder %s28, 2
      %p185 = por %p183, %p184
      %p187 = scmp.ne.s32.totalorder %s170, %s186
      %p188 = scmp.eq.s32.totalorder %s28, 0
      %p189 = por %p187, %p188
      %p190 = scmp.le.s32.totalorder 1, %s22
      %p191 = scmp.lt.s32.totalorder %s22, 4
      %p192 = pnand %p190, %p191
      %p193 = pneg %p192
      // Predicated region
      $region9: #{tpu_custom_call.1} parent=5 // pred_check
        _
      $region10: #{tpu_custom_call.1} parent=5 // pred_check_branch
        %195 = sbr.rel (%p192) target = $region12
      $region11: #{tpu_custom_call.1} parent=5 // pred_region
        %s196 = ssub.s32 %s22, 1
        // Predicated region
        $region13: #{tpu_custom_call.1} parent=11 // pred_check
          %p197 = pneg %p88
        $region14: #{tpu_custom_call.1} parent=11 // pred_check_branch
          %199 = sbr.rel (%p197) target = $region16
        $region15: #{tpu_custom_call.1} parent=11 // pred_region
          %s200 = smul.u32 48, %s32
          %s202 = ssub.s32 3072, 3072
          %203 = vsyncadd [#allocation7], %s202
          %s204 = smul.addr %s200, 64
          %s205 = scalar_lea.hbm %s1, %s204
          %s206 = sshll.u32 [#allocation6], 4
          %s207 = int_to_ptr.vmem [resolvable:$true] %s206
          %212 = dma.hbm_to_vmem [thread:$0]  %s205, 3072, %s207, [#allocation7], 64, 64, 4
        $region16: #{tpu_custom_call.1} parent=11 // pred_fallthru
          _
        // Predicated region
        $region17: #{tpu_custom_call.1} parent=11 // pred_check
          %p213 = pneg %p109
        $region18: #{tpu_custom_call.1} parent=11 // pred_check_branch
          %215 = sbr.rel (%p213) target = $region20
        $region19: #{tpu_custom_call.1} parent=11 // pred_region
          %s217 = ssub.s32 2048, 2048
          %218 = vsyncadd [#allocation7], %s217
          %s219 = sshll.u32 [#allocation8], 4
          %s220 = int_to_ptr.vmem [resolvable:$true] %s219
          %225 = dma.hbm_to_vmem [thread:$0]  %s2, 2048, %s220, [#allocation7], 128, 128, 8
        $region20: #{tpu_custom_call.1} parent=11 // pred_fallthru
          _
        // Predicated region
        $region21: #{tpu_custom_call.1} parent=11 // pred_check
          %p226 = pneg %p130
        $region22: #{tpu_custom_call.1} parent=11 // pred_check_branch
          %228 = sbr.rel (%p226) target = $region24
        $region23: #{tpu_custom_call.1} parent=11 // pred_region
          _
        $region24: #{tpu_custom_call.1} parent=11 // pred_fallthru
          _
      $region12: #{tpu_custom_call.1} parent=5 // pred_fallthru
        _
      %p229 = scmp.lt.s32.totalorder %s22, 3
      // Predicated region
      $region25: #{tpu_custom_call.1} parent=5 // pred_check
        %p230 = pneg %p229
      $region26: #{tpu_custom_call.1} parent=5 // pred_check_branch
        %232 = sbr.rel (%p230) target = $region28
      $region27: #{tpu_custom_call.1} parent=5 // pred_region
        // Predicated region
        $region29: #{tpu_custom_call.1} parent=27 // pred_check
          %p233 = pneg %p56
        $region30: #{tpu_custom_call.1} parent=27 // pred_check_branch
          %235 = sbr.rel (%p233) target = $region32
        $region31: #{tpu_custom_call.1} parent=27 // pred_region
          %s236 = sand.u32 %s46, 1
          %s237 = scalar_lea.sflag [#allocation4], %s236
          %s238 = sand.u32 %s46, 1
          %s239 = smul.addr %s238, 192
          %s240 = scalar_lea.vmem [#allocation3], %s239
          %s241 = smul.u32 16, %s29
          %s242 = smul.u32 3, %s30
          %s244 = ssub.s32 3072, 3072
          %245 = vsyncadd %s237, %s244
          %s246 = smul.addr %s241, 3
          %s247 = sadd.s32 %s242, %s246
          %s248 = smul.addr %s247, 64
          %s249 = scalar_lea.hbm %s0, %s248
          %s250 = sshll.u32 %s240, 4
          %s251 = int_to_ptr.vmem [resolvable:$true] %s250
          %256 = dma.hbm_to_vmem [thread:$0]  %s249, 3072, %s251, %s237, 192, 192, 12
        $region32: #{tpu_custom_call.1} parent=27 // pred_fallthru
          _
      $region28: #{tpu_custom_call.1} parent=5 // pred_fallthru
        _
      %p257 = scmp.le.s32.totalorder 1, %s22
      %p258 = scmp.lt.s32.totalorder %s22, 4
      %p259 = pnand %p257, %p258
      %p260 = pneg %p259
      // Predicated region
      $region33: #{tpu_custom_call.1} parent=5 // pred_check
        _
      $region34: #{tpu_custom_call.1} parent=5 // pred_check_branch
        %262 = sbr.rel (%p259) target = $region36
      $region35: #{tpu_custom_call.1} parent=5 // pred_region
        %s263 = ssub.s32 %s22, 1
        %s264 = sand.u32 %s49, 1
        %s265 = scalar_lea.sflag [#allocation4], %s264
        %s266 = sand.u32 %s49, 1
        %s267 = smul.addr %s266, 192
        %s268 = scalar_lea.vmem [#allocation3], %s267
        // Predicated region
        $region37: #{tpu_custom_call.1} parent=35 // pred_check
          %p269 = pneg %p62
        $region38: #{tpu_custom_call.1} parent=35 // pred_check_branch
          %271 = sbr.rel (%p269) target = $region40
        $region39: #{tpu_custom_call.1} parent=35 // pred_region
          %272 = dma.done %s265, 3072
        $region40: #{tpu_custom_call.1} parent=35 // pred_fallthru
          _
        // Predicated region
        $region41: #{tpu_custom_call.1} parent=35 // pred_check
          %p273 = pneg %p88
        $region42: #{tpu_custom_call.1} parent=35 // pred_check_branch
          %275 = sbr.rel (%p273) target = $region44
        $region43: #{tpu_custom_call.1} parent=35 // pred_region
          %276 = dma.done [#allocation7], 3072
        $region44: #{tpu_custom_call.1} parent=35 // pred_fallthru
          _
        // Predicated region
        $region45: #{tpu_custom_call.1} parent=35 // pred_check
          %p277 = pneg %p109
        $region46: #{tpu_custom_call.1} parent=35 // pred_check_branch
          %279 = sbr.rel (%p277) target = $region48
        $region47: #{tpu_custom_call.1} parent=35 // pred_region
          %280 = dma.done [#allocation7], 2048
        $region48: #{tpu_custom_call.1} parent=35 // pred_fallthru
          _
        %s281 = sand.u32 %s49, 1
        %s282 = scalar_lea.sflag [#allocation4], %s281
        %s283 = sand.u32 %s49, 1
        %s284 = smul.addr %s283, 192
        %s285 = scalar_lea.vmem [#allocation3], %s284
        %p286 = pneg %p62
        %p287 = pneg %p59
        %p288 = pneg %p88
        %p289 = pneg %p85
        %p290 = pneg %p109
        %p291 = pneg %p106
        %p292 = pneg %p130
        %p293 = pneg %p127
        %p294 = pneg %p156
        %p295 = pneg %p153
        %s296 = sand.u32 %s143, 1
        %s297 = scalar_lea.sflag [#allocation5], %s296
        %s298 = sand.u32 %s143, 1
        %s299 = smul.addr %s298, 128
        %s300 = scalar_lea.vmem [#allocation9], %s299
        %p301 = pneg %p182
        %p302 = pneg %p179
        %s303 = sand.u32 %s169, 1
        %s304 = scalar_lea.sflag [#allocation11], %s303
        %s305 = sand.u32 %s169, 1
        %s306 = smul.addr %s305, 128
        %s307 = scalar_lea.vmem [#allocation10], %s306
        %s308 = smul.u32 16, %s31
        %s309 = smul.u32 3, %s32
        %s310 = smul.u32 48, %s32
        %s311 = smul.u32 16, %s31
        %s312 = smul.u32 16, %s31
        %p314 = scmp.eq.s32.totalorder %s32, 0
        // Predicated region
        $region49: #{tpu_custom_call.1} parent=35 // pred_check
          %p315 = pneg %p314
        $region50: #{tpu_custom_call.1} parent=35 // pred_check_branch
          %317 = sbr.rel (%p315) target = $region52
        $region51: #{tpu_custom_call.1} parent=35 // pred_region
          %318 = vst [vmem:[#allocation2] sm:$0xff] 0.0
          %319 = vst [vmem:[#allocation2 + $0x8] sm:$0xff] 0.0
          %320 = vst [vmem:[#allocation2 + $0x10] sm:$0xff] 0.0
          %321 = vst [vmem:[#allocation2 + $0x18] sm:$0xff] 0.0
          %322 = vst [vmem:[#allocation2 + $0x20] sm:$0xff] 0.0
          %323 = vst [vmem:[#allocation2 + $0x28] sm:$0xff] 0.0
          %324 = vst [vmem:[#allocation2 + $0x30] sm:$0xff] 0.0
          %325 = vst [vmem:[#allocation2 + $0x38] sm:$0xff] 0.0
          %326 = vst [vmem:[#allocation2 + $0x40] sm:$0xff] 0.0
          %327 = vst [vmem:[#allocation2 + $0x48] sm:$0xff] 0.0
          %328 = vst [vmem:[#allocation2 + $0x50] sm:$0xff] 0.0
          %329 = vst [vmem:[#allocation2 + $0x58] sm:$0xff] 0.0
          %330 = vst [vmem:[#allocation2 + $0x60] sm:$0xff] 0.0
          %331 = vst [vmem:[#allocation2 + $0x68] sm:$0xff] 0.0
          %332 = vst [vmem:[#allocation2 + $0x70] sm:$0xff] 0.0
          %333 = vst [vmem:[#allocation2 + $0x78] sm:$0xff] 0.0
        $region52: #{tpu_custom_call.1} parent=35 // pred_fallthru
          _
        %v334 = vld [vmem:[#allocation2] sm:$0xff]
        %v335 = vld [vmem:[#allocation2 + $0x8] sm:$0xff]
        %v336 = vld [vmem:[#allocation2 + $0x10] sm:$0xff]
        %v337 = vld [vmem:[#allocation2 + $0x18] sm:$0xff]
        %v338 = vld [vmem:[#allocation2 + $0x20] sm:$0xff]
        %v339 = vld [vmem:[#allocation2 + $0x28] sm:$0xff]
        %v340 = vld [vmem:[#allocation2 + $0x30] sm:$0xff]
        %v341 = vld [vmem:[#allocation2 + $0x38] sm:$0xff]
        %v342 = vld [vmem:[#allocation2 + $0x40] sm:$0xff]
        %v343 = vld [vmem:[#allocation2 + $0x48] sm:$0xff]
        %v344 = vld [vmem:[#allocation2 + $0x50] sm:$0xff]
        %v345 = vld [vmem:[#allocation2 + $0x58] sm:$0xff]
        %v346 = vld [vmem:[#allocation2 + $0x60] sm:$0xff]
        %v347 = vld [vmem:[#allocation2 + $0x68] sm:$0xff]
        %v348 = vld [vmem:[#allocation2 + $0x70] sm:$0xff]
        %v349 = vld [vmem:[#allocation2 + $0x78] sm:$0xff]
        %v350 = vld [vmem:[%s268] sm:$0xff]
        %v351 = vld [vmem:[%s268 + $0x8] sm:$0xf]
        %v352 = vld [vmem:[%s268 + $0xc] sm:$0xff]
        %v353 = vld [vmem:[%s268 + $0x14] sm:$0xf]
        %v354 = vld [vmem:[%s268 + $0x18] sm:$0xff]
        %v355 = vld [vmem:[%s268 + $0x20] sm:$0xf]
        %v356 = vld [vmem:[%s268 + $0x24] sm:$0xff]
        %v357 = vld [vmem:[%s268 + $0x2c] sm:$0xf]
        %v358 = vld [vmem:[%s268 + $0x30] sm:$0xff]
        %v359 = vld [vmem:[%s268 + $0x38] sm:$0xf]
        %v360 = vld [vmem:[%s268 + $0x3c] sm:$0xff]
        %v361 = vld [vmem:[%s268 + $0x44] sm:$0xf]
        %v362 = vld [vmem:[%s268 + $0x48] sm:$0xff]
        %v363 = vld [vmem:[%s268 + $0x50] sm:$0xf]
        %v364 = vld [vmem:[%s268 + $0x54] sm:$0xff]
        %v365 = vld [vmem:[%s268 + $0x5c] sm:$0xf]
        %v366 = vld [vmem:[%s268 + $0x60] sm:$0xff]
        %v367 = vld [vmem:[%s268 + $0x68] sm:$0xf]
        %v368 = vld [vmem:[%s268 + $0x6c] sm:$0xff]
        %v369 = vld [vmem:[%s268 + $0x74] sm:$0xf]
        %v370 = vld [vmem:[%s268 + $0x78] sm:$0xff]
        %v371 = vld [vmem:[%s268 + $0x80] sm:$0xf]
        %v372 = vld [vmem:[%s268 + $0x84] sm:$0xff]
        %v373 = vld [vmem:[%s268 + $0x8c] sm:$0xf]
        %v374 = vld [vmem:[%s268 + $0x90] sm:$0xff]
        %v375 = vld [vmem:[%s268 + $0x98] sm:$0xf]
        %v376 = vld [vmem:[%s268 + $0x9c] sm:$0xff]
        %v377 = vld [vmem:[%s268 + $0xa4] sm:$0xf]
        %v378 = vld [vmem:[%s268 + $0xa8] sm:$0xff]
        %v379 = vld [vmem:[%s268 + $0xb0] sm:$0xf]
        %v380 = vld [vmem:[%s268 + $0xb4] sm:$0xff]
        %v381 = vld [vmem:[%s268 + $0xbc] sm:$0xf]
        %v382 = vld [vmem:[#allocation6] sm:$0xf]
        %v383 = vld [vmem:[#allocation6 + $0x4] sm:$0xf]
        %v384 = vld [vmem:[#allocation6 + $0x8] sm:$0xf]
        %v385 = vld [vmem:[#allocation6 + $0xc] sm:$0xf]
        %v386 = vld [vmem:[#allocation6 + $0x10] sm:$0xf]
        %v387 = vld [vmem:[#allocation6 + $0x14] sm:$0xf]
        %v388 = vld [vmem:[#allocation6 + $0x18] sm:$0xf]
        %v389 = vld [vmem:[#allocation6 + $0x1c] sm:$0xf]
        %v390 = vld [vmem:[#allocation6 + $0x20] sm:$0xf]
        %v391 = vld [vmem:[#allocation6 + $0x24] sm:$0xf]
        %v392 = vld [vmem:[#allocation6 + $0x28] sm:$0xf]
        %v393 = vld [vmem:[#allocation6 + $0x2c] sm:$0xf]
        %v394 = vld [vmem:[#allocation6 + $0x30] sm:$0xf]
        %v395 = vld [vmem:[#allocation6 + $0x34] sm:$0xf]
        %v396 = vld [vmem:[#allocation6 + $0x38] sm:$0xf]
        %v397 = vld [vmem:[#allocation6 + $0x3c] sm:$0xf]
        %v398 = vld [vmem:[#allocation6 + $0x40] sm:$0xf]
        %v399 = vld [vmem:[#allocation6 + $0x44] sm:$0xf]
        %v400 = vld [vmem:[#allocation6 + $0x48] sm:$0xf]
        %v401 = vld [vmem:[#allocation6 + $0x4c] sm:$0xf]
        %v402 = vld [vmem:[#allocation6 + $0x50] sm:$0xf]
        %v403 = vld [vmem:[#allocation6 + $0x54] sm:$0xf]
        %v404 = vld [vmem:[#allocation6 + $0x58] sm:$0xf]
        %v405 = vld [vmem:[#allocation6 + $0x5c] sm:$0xf]
        %v406 = vld [vmem:[#allocation6 + $0x60] sm:$0xf]
        %v407 = vld [vmem:[#allocation6 + $0x64] sm:$0xf]
        %v408 = vld [vmem:[#allocation6 + $0x68] sm:$0xf]
        %v409 = vld [vmem:[#allocation6 + $0x6c] sm:$0xf]
        %v410 = vld [vmem:[#allocation6 + $0x70] sm:$0xf]
        %v411 = vld [vmem:[#allocation6 + $0x74] sm:$0xf]
        %v412 = vld [vmem:[#allocation6 + $0x78] sm:$0xf]
        %v413 = vld [vmem:[#allocation6 + $0x7c] sm:$0xf]
        %v414 = vld [vmem:[#allocation6 + $0x80] sm:$0xf]
        %v415 = vld [vmem:[#allocation6 + $0x84] sm:$0xf]
        %v416 = vld [vmem:[#allocation6 + $0x88] sm:$0xf]
        %v417 = vld [vmem:[#allocation6 + $0x8c] sm:$0xf]
        %v418 = vld [vmem:[#allocation6 + $0x90] sm:$0xf]
        %v419 = vld [vmem:[#allocation6 + $0x94] sm:$0xf]
        %v420 = vld [vmem:[#allocation6 + $0x98] sm:$0xf]
        %v421 = vld [vmem:[#allocation6 + $0x9c] sm:$0xf]
        %v422 = vld [vmem:[#allocation6 + $0xa0] sm:$0xf]
        %v423 = vld [vmem:[#allocation6 + $0xa4] sm:$0xf]
        %v424 = vld [vmem:[#allocation6 + $0xa8] sm:$0xf]
        %v425 = vld [vmem:[#allocation6 + $0xac] sm:$0xf]
        %v426 = vld [vmem:[#allocation6 + $0xb0] sm:$0xf]
        %v427 = vld [vmem:[#allocation6 + $0xb4] sm:$0xf]
        %v428 = vld [vmem:[#allocation6 + $0xb8] sm:$0xf]
        %v429 = vld [vmem:[#allocation6 + $0xbc] sm:$0xf]
        %v462 = vunpack.c.l.b16 %v350
        %v463 = vunpack.c.h.b16 %v350
        %v464 = vunpack.c.l.b16 %v351
        %v465 = vunpack.c.l.b16 %v352
        %v466 = vunpack.c.h.b16 %v352
        %v467 = vunpack.c.l.b16 %v353
        %v468 = vunpack.c.l.b16 %v354
        %v469 = vunpack.c.h.b16 %v354
        %v470 = vunpack.c.l.b16 %v355
        %v471 = vunpack.c.l.b16 %v356
        %v472 = vunpack.c.h.b16 %v356
        %v473 = vunpack.c.l.b16 %v357
        %v474 = vunpack.c.l.b16 %v358
        %v475 = vunpack.c.h.b16 %v358
        %v476 = vunpack.c.l.b16 %v359
        %v477 = vunpack.c.l.b16 %v360
        %v478 = vunpack.c.h.b16 %v360
        %v479 = vunpack.c.l.b16 %v361
        %v480 = vunpack.c.l.b16 %v362
        %v481 = vunpack.c.h.b16 %v362
        %v482 = vunpack.c.l.b16 %v363
        %v483 = vunpack.c.l.b16 %v364
        %v484 = vunpack.c.h.b16 %v364
        %v485 = vunpack.c.l.b16 %v365
        %v486 = vunpack.c.l.b16 %v366
        %v487 = vunpack.c.h.b16 %v366
        %v488 = vunpack.c.l.b16 %v367
        %v489 = vunpack.c.l.b16 %v368
        %v490 = vunpack.c.h.b16 %v368
        %v491 = vunpack.c.l.b16 %v369
        %v492 = vunpack.c.l.b16 %v370
        %v493 = vunpack.c.h.b16 %v370
        %v494 = vunpack.c.l.b16 %v371
        %v495 = vunpack.c.l.b16 %v372
        %v496 = vunpack.c.h.b16 %v372
        %v497 = vunpack.c.l.b16 %v373
        %v498 = vunpack.c.l.b16 %v374
        %v499 = vunpack.c.h.b16 %v374
        %v500 = vunpack.c.l.b16 %v375
        %v501 = vunpack.c.l.b16 %v376
        %v502 = vunpack.c.h.b16 %v376
        %v503 = vunpack.c.l.b16 %v377
        %v504 = vunpack.c.l.b16 %v378
        %v505 = vunpack.c.h.b16 %v378
        %v506 = vunpack.c.l.b16 %v379
        %v507 = vunpack.c.l.b16 %v380
        %v508 = vunpack.c.h.b16 %v380
        %v509 = vunpack.c.l.b16 %v381
        %v510 = vpack.c.b16 %v465, %v462
        %v511 = vpack.c.b16 %v466, %v463
        %v512 = vpack.c.b16 %v467, %v464
        %v513 = vpack.c.b16 %v471, %v468
        %v514 = vpack.c.b16 %v472, %v469
        %v515 = vpack.c.b16 %v473, %v470
        %v516 = vpack.c.b16 %v477, %v474
        %v517 = vpack.c.b16 %v478, %v475
        %v518 = vpack.c.b16 %v479, %v476
        %v519 = vpack.c.b16 %v483, %v480
        %v520 = vpack.c.b16 %v484, %v481
        %v521 = vpack.c.b16 %v485, %v482
        %v522 = vpack.c.b16 %v489, %v486
        %v523 = vpack.c.b16 %v490, %v487
        %v524 = vpack.c.b16 %v491, %v488
        %v525 = vpack.c.b16 %v495, %v492
        %v526 = vpack.c.b16 %v496, %v493
        %v527 = vpack.c.b16 %v497, %v494
        %v528 = vpack.c.b16 %v501, %v498
        %v529 = vpack.c.b16 %v502, %v499
        %v530 = vpack.c.b16 %v503, %v500
        %v531 = vpack.c.b16 %v507, %v504
        %v532 = vpack.c.b16 %v508, %v505
        %v533 = vpack.c.b16 %v509, %v506
        %v606 = vunpack.c.l.b16 %v382
        %v607 = vunpack.c.l.b16 %v383
        %v608 = vunpack.c.l.b16 %v384
        %v609 = vunpack.c.l.b16 %v385
        %v610 = vunpack.c.l.b16 %v386
        %v611 = vunpack.c.l.b16 %v387
        %v612 = vunpack.c.l.b16 %v388
        %v613 = vunpack.c.l.b16 %v389
        %v614 = vunpack.c.l.b16 %v390
        %v615 = vunpack.c.l.b16 %v391
        %v616 = vunpack.c.l.b16 %v392
        %v617 = vunpack.c.l.b16 %v393
        %v618 = vunpack.c.l.b16 %v394
        %v619 = vunpack.c.l.b16 %v395
        %v620 = vunpack.c.l.b16 %v396
        %v621 = vunpack.c.l.b16 %v397
        %v622 = vunpack.c.l.b16 %v398
        %v623 = vunpack.c.l.b16 %v399
        %v624 = vunpack.c.l.b16 %v400
        %v625 = vunpack.c.l.b16 %v401
        %v626 = vunpack.c.l.b16 %v402
        %v627 = vunpack.c.l.b16 %v403
        %v628 = vunpack.c.l.b16 %v404
        %v629 = vunpack.c.l.b16 %v405
        %v630 = vunpack.c.l.b16 %v406
        %v631 = vunpack.c.l.b16 %v407
        %v632 = vunpack.c.l.b16 %v408
        %v633 = vunpack.c.l.b16 %v409
        %v634 = vunpack.c.l.b16 %v410
        %v635 = vunpack.c.l.b16 %v411
        %v636 = vunpack.c.l.b16 %v412
        %v637 = vunpack.c.l.b16 %v413
        %v638 = vunpack.c.l.b16 %v414
        %v639 = vunpack.c.l.b16 %v415
        %v640 = vunpack.c.l.b16 %v416
        %v641 = vunpack.c.l.b16 %v417
        %v642 = vunpack.c.l.b16 %v418
        %v643 = vunpack.c.l.b16 %v419
        %v644 = vunpack.c.l.b16 %v420
        %v645 = vunpack.c.l.b16 %v421
        %v646 = vunpack.c.l.b16 %v422
        %v647 = vunpack.c.l.b16 %v423
        %v648 = vunpack.c.l.b16 %v424
        %v649 = vunpack.c.l.b16 %v425
        %v650 = vunpack.c.l.b16 %v426
        %v651 = vunpack.c.l.b16 %v427
        %v652 = vunpack.c.l.b16 %v428
        %v653 = vunpack.c.l.b16 %v429
        %v654 = vpack.c.b16 %v607, %v606
        %v655 = vpack.c.b16 %v609, %v608
        %v656 = vpack.c.b16 %v611, %v610
        %v657 = vpack.c.b16 %v613, %v612
        %v658 = vpack.c.b16 %v615, %v614
        %v659 = vpack.c.b16 %v617, %v616
        %v660 = vpack.c.b16 %v619, %v618
        %v661 = vpack.c.b16 %v621, %v620
        %v662 = vpack.c.b16 %v623, %v622
        %v663 = vpack.c.b16 %v625, %v624
        %v664 = vpack.c.b16 %v627, %v626
        %v665 = vpack.c.b16 %v629, %v628
        %v666 = vpack.c.b16 %v631, %v630
        %v667 = vpack.c.b16 %v633, %v632
        %v668 = vpack.c.b16 %v635, %v634
        %v669 = vpack.c.b16 %v637, %v636
        %v670 = vpack.c.b16 %v639, %v638
        %v671 = vpack.c.b16 %v641, %v640
        %v672 = vpack.c.b16 %v643, %v642
        %v673 = vpack.c.b16 %v645, %v644
        %v674 = vpack.c.b16 %v647, %v646
        %v675 = vpack.c.b16 %v649, %v648
        %v676 = vpack.c.b16 %v651, %v650
        %v677 = vpack.c.b16 %v653, %v652
        %702 = vmatprep.subr.bf16.mxu0 0
        %703 = vmatpush1.bf16.msra.mxu0 %v654
        %704 = vmatprep.subr.bf16.mxu0 0
        %705 = vmatpush1.bf16.msra.mxu0 %v655
        %706 = vmatprep.subr.bf16.mxu0 0
        %707 = vmatpush1.bf16.msra.mxu0 %v656
        %708 = vmatprep.subr.bf16.mxu0 0
        %709 = vmatpush1.bf16.msra.mxu0 %v657
        %710 = vmatprep.subr.bf16.mxu0 0
        %711 = vmatpush1.bf16.msra.mxu0 %v658
        %712 = vmatprep.subr.bf16.mxu0 0
        %713 = vmatpush1.bf16.msra.mxu0 %v659
        %714 = vmatprep.subr.bf16.mxu0 0
        %715 = vmatpush1.bf16.msra.mxu0 %v660
        %716 = vmatprep.subr.bf16.mxu0 0
        %717 = vmatpush1.bf16.msra.mxu0 %v661
        %718 = vmatprep.subr.bf16.mxu0 0
        %719 = vmatpush1.bf16.msra.mxu0 %v662
        %720 = vmatprep.subr.bf16.mxu0 0
        %721 = vmatpush1.bf16.msra.mxu0 %v663
        %722 = vmatprep.subr.bf16.mxu0 0
        %723 = vmatpush1.bf16.msra.mxu0 %v664
        %724 = vmatprep.subr.bf16.mxu0 0
        %725 = vmatpush1.bf16.msra.mxu0 %v665
        %726 = vmatprep.subr.bf16.mxu0 0
        %727 = vmatpush1.bf16.msra.mxu0 %v666
        %728 = vmatprep.subr.bf16.mxu0 0
        %729 = vmatpush1.bf16.msra.mxu0 %v667
        %730 = vmatprep.subr.bf16.mxu0 0
        %731 = vmatpush1.bf16.msra.mxu0 %v668
        %732 = vmatprep.subr.bf16.mxu0 0
        %733 = vmatpush1.bf16.msra.mxu0 %v669
        %734 = vmatprep.mubr.bf16.mxu0 %v511
        %735 = vmatmul.mubr.bf16.gmra.mrb[0].mxu0 %v510
        %v736 = vpop.f32.mrb[0].mxu0
        %v737 = vadd.f32 0.0, %v736
        %v738 = vpop.f32.mrb[0].mxu0
        %v739 = vpop.f32.mrb[0].mxu0
        %v740 = vadd.f32 0.0, %v739
        %v741 = vpop.f32.mrb[0].mxu0
        %742 = vmatprep.mubr.bf16.mxu0 %v514
        %743 = vmatmul.mubr.bf16.gmra.mrb[0].mxu0 %v513
        %v744 = vpop.f32.mrb[0].mxu0
        %v745 = vadd.f32 0.0, %v744
        %v746 = vpop.f32.mrb[0].mxu0
        %v747 = vpop.f32.mrb[0].mxu0
        %v748 = vadd.f32 0.0, %v747
        %v749 = vpop.f32.mrb[0].mxu0
        %750 = vmatprep.mubr.bf16.mxu0 %v517
        %751 = vmatmul.mubr.bf16.gmra.mrb[0].mxu0 %v516
        %v752 = vpop.f32.mrb[0].mxu0
        %v753 = vadd.f32 0.0, %v752
        %v754 = vpop.f32.mrb[0].mxu0
        %v755 = vpop.f32.mrb[0].mxu0
        %v756 = vadd.f32 0.0, %v755
        %v757 = vpop.f32.mrb[0].mxu0
        %758 = vmatprep.mubr.bf16.mxu0 %v520
        %759 = vmatmul.mubr.bf16.gmra.mrb[0].mxu0 %v519
        %v760 = vpop.f32.mrb[0].mxu0
        %v761 = vadd.f32 0.0, %v760
        %v762 = vpop.f32.mrb[0].mxu0
        %v763 = vpop.f32.mrb[0].mxu0
        %v764 = vadd.f32 0.0, %v763
        %v765 = vpop.f32.mrb[0].mxu0
        %766 = vmatprep.mubr.bf16.mxu0 %v523
        %767 = vmatmul.mubr.bf16.gmra.mrb[0].mxu0 %v522
        %v768 = vpop.f32.mrb[0].mxu0
        %v769 = vadd.f32 0.0, %v768
        %v770 = vpop.f32.mrb[0].mxu0
        %v771 = vpop.f32.mrb[0].mxu0
        %v772 = vadd.f32 0.0, %v771
        %v773 = vpop.f32.mrb[0].mxu0
        %774 = vmatprep.mubr.bf16.mxu0 %v526
        %775 = vmatmul.mubr.bf16.gmra.mrb[0].mxu0 %v525
        %v776 = vpop.f32.mrb[0].mxu0
        %v777 = vadd.f32 0.0, %v776
        %v778 = vpop.f32.mrb[0].mxu0
        %v779 = vpop.f32.mrb[0].mxu0
        %v780 = vadd.f32 0.0, %v779
        %v781 = vpop.f32.mrb[0].mxu0
        %782 = vmatprep.mubr.bf16.mxu0 %v529
        %783 = vmatmul.mubr.bf16.gmra.mrb[0].mxu0 %v528
        %v784 = vpop.f32.mrb[0].mxu0
        %v785 = vadd.f32 0.0, %v784
        %v786 = vpop.f32.mrb[0].mxu0
        %v787 = vpop.f32.mrb[0].mxu0
        %v788 = vadd.f32 0.0, %v787
        %v789 = vpop.f32.mrb[0].mxu0
        %790 = vmatprep.mubr.bf16.mxu0 %v532
        %791 = vmatmul.mubr.bf16.gmra.mrb[0].mxu0 %v531
        %v792 = vpop.f32.mrb[0].mxu0
        %v793 = vadd.f32 0.0, %v792
        %v794 = vpop.f32.mrb[0].mxu0
        %v795 = vpop.f32.mrb[0].mxu0
        %v796 = vadd.f32 0.0, %v795
        %v797 = vpop.f32.mrb[0].mxu0
        %798 = vdwg.mxu0
        %799 = vmatprep.subr.bf16.mxu0 0
        %800 = vmatpush1.bf16.msra.mxu0 %v670
        %801 = vmatprep.subr.bf16.mxu0 0
        %802 = vmatpush1.bf16.msra.mxu0 %v671
        %803 = vmatprep.subr.bf16.mxu0 0
        %804 = vmatpush1.bf16.msra.mxu0 %v672
        %805 = vmatprep.subr.bf16.mxu0 0
        %806 = vmatpush1.bf16.msra.mxu0 %v673
        %807 = vmatprep.subr.bf16.mxu0 0
        %808 = vmatpush1.bf16.msra.mxu0 %v674
        %809 = vmatprep.subr.bf16.mxu0 0
        %810 = vmatpush1.bf16.msra.mxu0 %v675
        %811 = vmatprep.subr.bf16.mxu0 0
        %812 = vmatpush1.bf16.msra.mxu0 %v676
        %813 = vmatprep.subr.bf16.mxu0 0
        %814 = vmatpush1.bf16.msra.mxu0 %v677
        %815 = vmatprep.subr.bf16.mxu0 0
        %816 = vmatpush1.bf16.msra.mxu0 0
        %817 = vmatprep.subr.bf16.mxu0 0
        %818 = vmatpush1.bf16.msra.mxu0 0
        %819 = vmatprep.subr.bf16.mxu0 0
        %820 = vmatpush1.bf16.msra.mxu0 0
        %821 = vmatprep.subr.bf16.mxu0 0
        %822 = vmatpush1.bf16.msra.mxu0 0
        %823 = vmatprep.subr.bf16.mxu0 0
        %824 = vmatpush1.bf16.msra.mxu0 0
        %825 = vmatprep.subr.bf16.mxu0 0
        %826 = vmatpush1.bf16.msra.mxu0 0
        %827 = vmatprep.subr.bf16.mxu0 0
        %828 = vmatpush1.bf16.msra.mxu0 0
        %829 = vmatprep.subr.bf16.mxu0 0
        %830 = vmatpush1.bf16.msra.mxu0 0
        %831 = vmatprep.mubr.bf16.mxu0 0
        %832 = vmatmul.mubr.bf16.gmra.mrb[0].mxu0 %v512
        %v833 = vpop.f32.mrb[0].mxu0
        %v834 = vadd.f32 %v737, %v833
        %v835 = vpop.f32.mrb[0].mxu0
        %v836 = vpop.f32.mrb[0].mxu0
        %v837 = vadd.f32 %v740, %v836
        %v838 = vpop.f32.mrb[0].mxu0
        %839 = vmatprep.mubr.bf16.mxu0 0
        %840 = vmatmul.mubr.bf16.gmra.mrb[0].mxu0 %v515
        %v841 = vpop.f32.mrb[0].mxu0
        %v842 = vadd.f32 %v745, %v841
        %v843 = vpop.f32.mrb[0].mxu0
        %v844 = vpop.f32.mrb[0].mxu0
        %v845 = vadd.f32 %v748, %v844
        %v846 = vpop.f32.mrb[0].mxu0
        %847 = vmatprep.mubr.bf16.mxu0 0
        %848 = vmatmul.mubr.bf16.gmra.mrb[0].mxu0 %v518
        %v849 = vpop.f32.mrb[0].mxu0
        %v850 = vadd.f32 %v753, %v849
        %v851 = vpop.f32.mrb[0].mxu0
        %v852 = vpop.f32.mrb[0].mxu0
        %v853 = vadd.f32 %v756, %v852
        %v854 = vpop.f32.mrb[0].mxu0
        %855 = vmatprep.mubr.bf16.mxu0 0
        %856 = vmatmul.mubr.bf16.gmra.mrb[0].mxu0 %v521
        %v857 = vpop.f32.mrb[0].mxu0
        %v858 = vadd.f32 %v761, %v857
        %v859 = vpop.f32.mrb[0].mxu0
        %v860 = vpop.f32.mrb[0].mxu0
        %v861 = vadd.f32 %v764, %v860
        %v862 = vpop.f32.mrb[0].mxu0
        %863 = vmatprep.mubr.bf16.mxu0 0
        %864 = vmatmul.mubr.bf16.gmra.mrb[0].mxu0 %v524
        %v865 = vpop.f32.mrb[0].mxu0
        %v866 = vadd.f32 %v769, %v865
        %v867 = vpop.f32.mrb[0].mxu0
        %v868 = vpop.f32.mrb[0].mxu0
        %v869 = vadd.f32 %v772, %v868
        %v870 = vpop.f32.mrb[0].mxu0
        %871 = vmatprep.mubr.bf16.mxu0 0
        %872 = vmatmul.mubr.bf16.gmra.mrb[0].mxu0 %v527
        %v873 = vpop.f32.mrb[0].mxu0
        %v874 = vadd.f32 %v777, %v873
        %v875 = vpop.f32.mrb[0].mxu0
        %v876 = vpop.f32.mrb[0].mxu0
        %v877 = vadd.f32 %v780, %v876
        %v878 = vpop.f32.mrb[0].mxu0
        %879 = vmatprep.mubr.bf16.mxu0 0
        %880 = vmatmul.mubr.bf16.gmra.mrb[0].mxu0 %v530
        %v881 = vpop.f32.mrb[0].mxu0
        %v882 = vadd.f32 %v785, %v881
        %v883 = vpop.f32.mrb[0].mxu0
        %v884 = vpop.f32.mrb[0].mxu0
        %v885 = vadd.f32 %v788, %v884
        %v886 = vpop.f32.mrb[0].mxu0
        %887 = vmatprep.mubr.bf16.mxu0 0
        %888 = vmatmul.mubr.bf16.gmra.mrb[0].mxu0 %v533
        %v889 = vpop.f32.mrb[0].mxu0
        %v890 = vadd.f32 %v793, %v889
        %v891 = vpop.f32.mrb[0].mxu0
        %v892 = vpop.f32.mrb[0].mxu0
        %v893 = vadd.f32 %v796, %v892
        %v894 = vpop.f32.mrb[0].mxu0
        %895 = vdwg.mxu0
        %v896 = vadd.f32 %v334, %v834
        %v897 = vadd.f32 %v335, %v837
        %v898 = vadd.f32 %v336, %v842
        %v899 = vadd.f32 %v337, %v845
        %v900 = vadd.f32 %v338, %v850
        %v901 = vadd.f32 %v339, %v853
        %v902 = vadd.f32 %v340, %v858
        %v903 = vadd.f32 %v341, %v861
        %v904 = vadd.f32 %v342, %v866
        %v905 = vadd.f32 %v343, %v869
        %v906 = vadd.f32 %v344, %v874
        %v907 = vadd.f32 %v345, %v877
        %v908 = vadd.f32 %v346, %v882
        %v909 = vadd.f32 %v347, %v885
        %v910 = vadd.f32 %v348, %v890
        %v911 = vadd.f32 %v349, %v893
        %912 = vst [vmem:[#allocation2] sm:$0xff] %v896
        %913 = vst [vmem:[#allocation2 + $0x8] sm:$0xff] %v897
        %914 = vst [vmem:[#allocation2 + $0x10] sm:$0xff] %v898
        %915 = vst [vmem:[#allocation2 + $0x18] sm:$0xff] %v899
        %916 = vst [vmem:[#allocation2 + $0x20] sm:$0xff] %v900
        %917 = vst [vmem:[#allocation2 + $0x28] sm:$0xff] %v901
        %918 = vst [vmem:[#allocation2 + $0x30] sm:$0xff] %v902
        %919 = vst [vmem:[#allocation2 + $0x38] sm:$0xff] %v903
        %920 = vst [vmem:[#allocation2 + $0x40] sm:$0xff] %v904
        %921 = vst [vmem:[#allocation2 + $0x48] sm:$0xff] %v905
        %922 = vst [vmem:[#allocation2 + $0x50] sm:$0xff] %v906
        %923 = vst [vmem:[#allocation2 + $0x58] sm:$0xff] %v907
        %924 = vst [vmem:[#allocation2 + $0x60] sm:$0xff] %v908
        %925 = vst [vmem:[#allocation2 + $0x68] sm:$0xff] %v909
        %926 = vst [vmem:[#allocation2 + $0x70] sm:$0xff] %v910
        %927 = vst [vmem:[#allocation2 + $0x78] sm:$0xff] %v911
        // Predicated region
        $region53: #{tpu_custom_call.1} parent=35 // pred_check
          %p928 = pneg %p314
        $region54: #{tpu_custom_call.1} parent=35 // pred_check_branch
          %930 = sbr.rel (%p928) target = $region56
        $region55: #{tpu_custom_call.1} parent=35 // pred_region
          %v931 = vld [vmem:[#allocation2] sm:$0xff]
          %v932 = vld [vmem:[#allocation2 + $0x8] sm:$0xff]
          %v933 = vld [vmem:[#allocation2 + $0x10] sm:$0xff]
          %v934 = vld [vmem:[#allocation2 + $0x18] sm:$0xff]
          %v935 = vld [vmem:[#allocation2 + $0x20] sm:$0xff]
          %v936 = vld [vmem:[#allocation2 + $0x28] sm:$0xff]
          %v937 = vld [vmem:[#allocation2 + $0x30] sm:$0xff]
          %v938 = vld [vmem:[#allocation2 + $0x38] sm:$0xff]
          %v939 = vld [vmem:[#allocation2 + $0x40] sm:$0xff]
          %v940 = vld [vmem:[#allocation2 + $0x48] sm:$0xff]
          %v941 = vld [vmem:[#allocation2 + $0x50] sm:$0xff]
          %v942 = vld [vmem:[#allocation2 + $0x58] sm:$0xff]
          %v943 = vld [vmem:[#allocation2 + $0x60] sm:$0xff]
          %v944 = vld [vmem:[#allocation2 + $0x68] sm:$0xff]
          %v945 = vld [vmem:[#allocation2 + $0x70] sm:$0xff]
          %v946 = vld [vmem:[#allocation2 + $0x78] sm:$0xff]
          %947 = vst [vmem:[%s307] sm:$0xff] %v931
          %948 = vst [vmem:[%s307 + $0x8] sm:$0xff] %v932
          %949 = vst [vmem:[%s307 + $0x10] sm:$0xff] %v933
          %950 = vst [vmem:[%s307 + $0x18] sm:$0xff] %v934
          %951 = vst [vmem:[%s307 + $0x20] sm:$0xff] %v935
          %952 = vst [vmem:[%s307 + $0x28] sm:$0xff] %v936
          %953 = vst [vmem:[%s307 + $0x30] sm:$0xff] %v937
          %954 = vst [vmem:[%s307 + $0x38] sm:$0xff] %v938
          %955 = vst [vmem:[%s307 + $0x40] sm:$0xff] %v939
          %956 = vst [vmem:[%s307 + $0x48] sm:$0xff] %v940
          %957 = vst [vmem:[%s307 + $0x50] sm:$0xff] %v941
          %958 = vst [vmem:[%s307 + $0x58] sm:$0xff] %v942
          %959 = vst [vmem:[%s307 + $0x60] sm:$0xff] %v943
          %960 = vst [vmem:[%s307 + $0x68] sm:$0xff] %v944
          %961 = vst [vmem:[%s307 + $0x70] sm:$0xff] %v945
          %962 = vst [vmem:[%s307 + $0x78] sm:$0xff] %v946
          %v963 = vld [vmem:[#allocation8] sm:$0xff]
          %v964 = vld [vmem:[#allocation8 + $0x8] sm:$0xff]
          %v965 = vld [vmem:[#allocation8 + $0x10] sm:$0xff]
          %v966 = vld [vmem:[#allocation8 + $0x18] sm:$0xff]
          %v967 = vld [vmem:[#allocation8 + $0x20] sm:$0xff]
          %v968 = vld [vmem:[#allocation8 + $0x28] sm:$0xff]
          %v969 = vld [vmem:[#allocation8 + $0x30] sm:$0xff]
          %v970 = vld [vmem:[#allocation8 + $0x38] sm:$0xff]
          %v971 = vld [vmem:[#allocation8 + $0x40] sm:$0xff]
          %v972 = vld [vmem:[#allocation8 + $0x48] sm:$0xff]
          %v973 = vld [vmem:[#allocation8 + $0x50] sm:$0xff]
          %v974 = vld [vmem:[#allocation8 + $0x58] sm:$0xff]
          %v975 = vld [vmem:[#allocation8 + $0x60] sm:$0xff]
          %v976 = vld [vmem:[#allocation8 + $0x68] sm:$0xff]
          %v977 = vld [vmem:[#allocation8 + $0x70] sm:$0xff]
          %v978 = vld [vmem:[#allocation8 + $0x78] sm:$0xff]
          %v979 = vld [vmem:[%s3] sm:$0x1]
          %v981 = vlaneseq
          %v982 = vshrl.u32 %v981, 7
          %v983 = vsub.s32 0, %v982
          %v984 = vrot.slane %v979, %v983
          %986 = vmatprep.subr.mxu0 0.0
          %987 = vmatpush1.msra.mxu0 %v963
          %988 = vmatprep.subr.mxu0 0.0
          %989 = vmatpush1.msra.mxu0 %v964
          %990 = vmatprep.subr.mxu0 0.0
          %991 = vmatpush1.msra.mxu0 %v965
          %992 = vmatprep.subr.mxu0 0.0
          %993 = vmatpush1.msra.mxu0 %v966
          %994 = vmatprep.subr.mxu0 0.0
          %995 = vmatpush1.msra.mxu0 %v967
          %996 = vmatprep.subr.mxu0 0.0
          %997 = vmatpush1.msra.mxu0 %v968
          %998 = vmatprep.subr.mxu0 0.0
          %999 = vmatpush1.msra.mxu0 %v969
          %1000 = vmatprep.subr.mxu0 0.0
          %1001 = vmatpush1.msra.mxu0 %v970
          %1002 = vmatprep.subr.mxu0 0.0
          %1003 = vmatpush1.msra.mxu0 %v971
          %1004 = vmatprep.subr.mxu0 0.0
          %1005 = vmatpush1.msra.mxu0 %v972
          %1006 = vmatprep.subr.mxu0 0.0
          %1007 = vmatpush1.msra.mxu0 %v973
          %1008 = vmatprep.subr.mxu0 0.0
          %1009 = vmatpush1.msra.mxu0 %v974
          %1010 = vmatprep.subr.mxu0 0.0
          %1011 = vmatpush1.msra.mxu0 %v975
          %1012 = vmatprep.subr.mxu0 0.0
          %1013 = vmatpush1.msra.mxu0 %v976
          %1014 = vmatprep.subr.mxu0 0.0
          %1015 = vmatpush1.msra.mxu0 %v977
          %1016 = vmatprep.subr.mxu0 0.0
          %1017 = vmatpush1.msra.mxu0 %v978
          %1018 = vmatprep.subr.mxu0 0.0
          %1019 = vmatpush1.msra.mxu0 0.0
          %1020 = vmatprep.subr.mxu0 0.0
          %1021 = vmatpush1.msra.mxu0 0.0
          %1022 = vmatprep.subr.mxu0 0.0
          %1023 = vmatpush1.msra.mxu0 0.0
          %1024 = vmatprep.subr.mxu0 0.0
          %1025 = vmatpush1.msra.mxu0 0.0
          %1026 = vmatprep.subr.mxu0 0.0
          %1027 = vmatpush1.msra.mxu0 0.0
          %1028 = vmatprep.subr.mxu0 0.0
          %1029 = vmatpush1.msra.mxu0 0.0
          %1030 = vmatprep.subr.mxu0 0.0
          %1031 = vmatpush1.msra.mxu0 0.0
          %1032 = vmatprep.subr.mxu0 0.0
          %1033 = vmatpush1.msra.mxu0 0.0
          %1034 = vmatprep.subr.mxu0 0.0
          %1035 = vmatpush1.msra.mxu0 0.0
          %1036 = vmatprep.subr.mxu0 0.0
          %1037 = vmatpush1.msra.mxu0 0.0
          %1038 = vmatprep.subr.mxu0 0.0
          %1039 = vmatpush1.msra.mxu0 0.0
          %1040 = vmatprep.subr.mxu0 0.0
          %1041 = vmatpush1.msra.mxu0 0.0
          %1042 = vmatprep.subr.mxu0 0.0
          %1043 = vmatpush1.msra.mxu0 0.0
          %1044 = vmatprep.subr.mxu0 0.0
          %1045 = vmatpush1.msra.mxu0 0.0
          %1046 = vmatprep.subr.mxu0 0.0
          %1047 = vmatpush1.msra.mxu0 0.0
          %1048 = vmatprep.subr.mxu0 0.0
          %1049 = vmatpush1.msra.mxu0 0.0
          %1050 = vmatprep.mubr.f32.mxu0 0.0
          %1051 = vmatmul.mubr.f32.gmra.mrb[0].mxu0 %v931
          %v1052 = vpop.f32.mrb[0].mxu0
          %v1053 = vadd.f32 %v984, %v1052
          %v1054 = vpop.f32.mrb[0].mxu0
          %1055 = vmatprep.mubr.f32.mxu0 0.0
          %1056 = vmatmul.mubr.f32.gmra.mrb[0].mxu0 %v932
          %v1057 = vpop.f32.mrb[0].mxu0
          %v1058 = vadd.f32 %v984, %v1057
          %v1059 = vpop.f32.mrb[0].mxu0
          %1060 = vmatprep.mubr.f32.mxu0 0.0
          %1061 = vmatmul.mubr.f32.gmra.mrb[0].mxu0 %v933
          %v1062 = vpop.f32.mrb[0].mxu0
          %v1063 = vadd.f32 %v984, %v1062
          %v1064 = vpop.f32.mrb[0].mxu0
          %1065 = vmatprep.mubr.f32.mxu0 0.0
          %1066 = vmatmul.mubr.f32.gmra.mrb[0].mxu0 %v934
          %v1067 = vpop.f32.mrb[0].mxu0
          %v1068 = vadd.f32 %v984, %v1067
          %v1069 = vpop.f32.mrb[0].mxu0
          %1070 = vmatprep.mubr.f32.mxu0 0.0
          %1071 = vmatmul.mubr.f32.gmra.mrb[0].mxu0 %v935
          %v1072 = vpop.f32.mrb[0].mxu0
          %v1073 = vadd.f32 %v984, %v1072
          %v1074 = vpop.f32.mrb[0].mxu0
          %1075 = vmatprep.mubr.f32.mxu0 0.0
          %1076 = vmatmul.mubr.f32.gmra.mrb[0].mxu0 %v936
          %v1077 = vpop.f32.mrb[0].mxu0
          %v1078 = vadd.f32 %v984, %v1077
          %v1079 = vpop.f32.mrb[0].mxu0
          %1080 = vmatprep.mubr.f32.mxu0 0.0
          %1081 = vmatmul.mubr.f32.gmra.mrb[0].mxu0 %v937
          %v1082 = vpop.f32.mrb[0].mxu0
          %v1083 = vadd.f32 %v984, %v1082
          %v1084 = vpop.f32.mrb[0].mxu0
          %1085 = vmatprep.mubr.f32.mxu0 0.0
          %1086 = vmatmul.mubr.f32.gmra.mrb[0].mxu0 %v938
          %v1087 = vpop.f32.mrb[0].mxu0
          %v1088 = vadd.f32 %v984, %v1087
          %v1089 = vpop.f32.mrb[0].mxu0
          %1090 = vmatprep.mubr.f32.mxu0 0.0
          %1091 = vmatmul.mubr.f32.gmra.mrb[0].mxu0 %v939
          %v1092 = vpop.f32.mrb[0].mxu0
          %v1093 = vadd.f32 %v984, %v1092
          %v1094 = vpop.f32.mrb[0].mxu0
          %1095 = vmatprep.mubr.f32.mxu0 0.0
          %1096 = vmatmul.mubr.f32.gmra.mrb[0].mxu0 %v940
          %v1097 = vpop.f32.mrb[0].mxu0
          %v1098 = vadd.f32 %v984, %v1097
          %v1099 = vpop.f32.mrb[0].mxu0
          %1100 = vmatprep.mubr.f32.mxu0 0.0
          %1101 = vmatmul.mubr.f32.gmra.mrb[0].mxu0 %v941
          %v1102 = vpop.f32.mrb[0].mxu0
          %v1103 = vadd.f32 %v984, %v1102
          %v1104 = vpop.f32.mrb[0].mxu0
          %1105 = vmatprep.mubr.f32.mxu0 0.0
          %1106 = vmatmul.mubr.f32.gmra.mrb[0].mxu0 %v942
          %v1107 = vpop.f32.mrb[0].mxu0
          %v1108 = vadd.f32 %v984, %v1107
          %v1109 = vpop.f32.mrb[0].mxu0
          %1110 = vmatprep.mubr.f32.mxu0 0.0
          %1111 = vmatmul.mubr.f32.gmra.mrb[0].mxu0 %v943
          %v1112 = vpop.f32.mrb[0].mxu0
          %v1113 = vadd.f32 %v984, %v1112
          %v1114 = vpop.f32.mrb[0].mxu0
          %1115 = vmatprep.mubr.f32.mxu0 0.0
          %1116 = vmatmul.mubr.f32.gmra.mrb[0].mxu0 %v944
          %v1117 = vpop.f32.mrb[0].mxu0
          %v1118 = vadd.f32 %v984, %v1117
          %v1119 = vpop.f32.mrb[0].mxu0
          %1120 = vmatprep.mubr.f32.mxu0 0.0
          %1121 = vmatmul.mubr.f32.gmra.mrb[0].mxu0 %v945
          %v1122 = vpop.f32.mrb[0].mxu0
          %v1123 = vadd.f32 %v984, %v1122
          %v1124 = vpop.f32.mrb[0].mxu0
          %1125 = vmatprep.mubr.f32.mxu0 0.0
          %1126 = vmatmul.mubr.f32.gmra.mrb[0].mxu0 %v946
          %v1127 = vpop.f32.mrb[0].mxu0
          %v1128 = vadd.f32 %v984, %v1127
          %v1129 = vpop.f32.mrb[0].mxu0
          %1130 = vdwg.mxu0
          %1131 = vst [vmem:[%s300] sm:$0xff] %v1053
          %1132 = vst [vmem:[%s300 + $0x8] sm:$0xff] %v1058
          %1133 = vst [vmem:[%s300 + $0x10] sm:$0xff] %v1063
          %1134 = vst [vmem:[%s300 + $0x18] sm:$0xff] %v1068
          %1135 = vst [vmem:[%s300 + $0x20] sm:$0xff] %v1073
          %1136 = vst [vmem:[%s300 + $0x28] sm:$0xff] %v1078
          %1137 = vst [vmem:[%s300 + $0x30] sm:$0xff] %v1083
          %1138 = vst [vmem:[%s300 + $0x38] sm:$0xff] %v1088
          %1139 = vst [vmem:[%s300 + $0x40] sm:$0xff] %v1093
          %1140 = vst [vmem:[%s300 + $0x48] sm:$0xff] %v1098
          %1141 = vst [vmem:[%s300 + $0x50] sm:$0xff] %v1103
          %1142 = vst [vmem:[%s300 + $0x58] sm:$0xff] %v1108
          %1143 = vst [vmem:[%s300 + $0x60] sm:$0xff] %v1113
          %1144 = vst [vmem:[%s300 + $0x68] sm:$0xff] %v1118
          %1145 = vst [vmem:[%s300 + $0x70] sm:$0xff] %v1123
          %1146 = vst [vmem:[%s300 + $0x78] sm:$0xff] %v1128
        $region56: #{tpu_custom_call.1} parent=35 // pred_fallthru
          _
        %s1147 = sand.u32 %s143, 1
        %s1148 = scalar_lea.sflag [#allocation5], %s1147
        %s1149 = sand.u32 %s143, 1
        %s1150 = smul.addr %s1149, 128
        %s1151 = scalar_lea.vmem [#allocation9], %s1150
        %s1152 = sand.u32 %s169, 1
        %s1153 = scalar_lea.sflag [#allocation11], %s1152
        %s1154 = sand.u32 %s169, 1
        %s1155 = smul.addr %s1154, 128
        %s1156 = scalar_lea.vmem [#allocation10], %s1155
        // Predicated region
        $region57: #{tpu_custom_call.1} parent=35 // pred_check
          %p1157 = pneg %p153
        $region58: #{tpu_custom_call.1} parent=35 // pred_check_branch
          %1159 = sbr.rel (%p1157) target = $region60
        $region59: #{tpu_custom_call.1} parent=35 // pred_region
          %s1160 = smul.u32 16, %s31
          %s1162 = ssub.s32 2048, 2048
          %1163 = vsyncadd %s1148, %s1162
          %s1164 = smul.addr %s1160, 128
          %s1165 = scalar_lea.hbm %s4, %s1164
          %s1166 = sshll.u32 %s1151, 4
          %s1167 = int_to_ptr.vmem [resolvable:$true] %s1166
          %1172 = dma.vmem_to_hbm [thread:$0]  %s1167, 2048, %s1165, %s1148, 128, 128, 8
        $region60: #{tpu_custom_call.1} parent=35 // pred_fallthru
          _
        // Predicated region
        $region61: #{tpu_custom_call.1} parent=35 // pred_check
          %p1173 = pneg %p179
        $region62: #{tpu_custom_call.1} parent=35 // pred_check_branch
          %1175 = sbr.rel (%p1173) target = $region64
        $region63: #{tpu_custom_call.1} parent=35 // pred_region
          %s1176 = smul.u32 16, %s31
          %s1178 = ssub.s32 2048, 2048
          %1179 = vsyncadd %s1153, %s1178
          %s1180 = smul.addr %s1176, 128
          %s1181 = scalar_lea.hbm %s5, %s1180
          %s1182 = sshll.u32 %s1156, 4
          %s1183 = int_to_ptr.vmem [resolvable:$true] %s1182
          %1188 = dma.vmem_to_hbm [thread:$0]  %s1183, 2048, %s1181, %s1153, 128, 128, 8
        $region64: #{tpu_custom_call.1} parent=35 // pred_fallthru
          _
      $region36: #{tpu_custom_call.1} parent=5 // pred_fallthru
        _
      %p1189 = scmp.le.s32.totalorder 2, %s22
      // Predicated region
      $region65: #{tpu_custom_call.1} parent=5 // pred_check
        %p1190 = pneg %p1189
      $region66: #{tpu_custom_call.1} parent=5 // pred_check_branch
        %1192 = sbr.rel (%p1190) target = $region68
      $region67: #{tpu_custom_call.1} parent=5 // pred_region
        %s1193 = ssub.s32 %s22, 2
        // Predicated region
        $region69: #{tpu_custom_call.1} parent=67 // pred_check
          %p1194 = pneg %p159
        $region70: #{tpu_custom_call.1} parent=67 // pred_check_branch
          %1196 = sbr.rel (%p1194) target = $region72
        $region71: #{tpu_custom_call.1} parent=67 // pred_region
          %s1197 = sand.u32 %s144, 1
          %s1198 = scalar_lea.sflag [#allocation5], %s1197
          %s1199 = sand.u32 %s144, 1
          %s1200 = smul.addr %s1199, 128
          %s1201 = scalar_lea.vmem [#allocation9], %s1200
          %1202 = dma.done %s1198, 2048
        $region72: #{tpu_custom_call.1} parent=67 // pred_fallthru
          _
        // Predicated region
        $region73: #{tpu_custom_call.1} parent=67 // pred_check
          %p1203 = pneg %p185
        $region74: #{tpu_custom_call.1} parent=67 // pred_check_branch
          %1205 = sbr.rel (%p1203) target = $region76
        $region75: #{tpu_custom_call.1} parent=67 // pred_region
          %s1206 = sand.u32 %s170, 1
          %s1207 = scalar_lea.sflag [#allocation11], %s1206
          %s1208 = sand.u32 %s170, 1
          %s1209 = smul.addr %s1208, 128
          %s1210 = scalar_lea.vmem [#allocation10], %s1209
          %1211 = dma.done %s1207, 2048
        $region76: #{tpu_custom_call.1} parent=67 // pred_fallthru
          _
      $region68: #{tpu_custom_call.1} parent=5 // pred_fallthru
        _
    $region6: #{tpu_custom_call.1} parent=1 // loop_footer
      %s26 = sadd.s32 1, %s22
    $region7: #{tpu_custom_call.1} parent=1 // loop_footer_branch
      %21 = sbr.rel target = $region3
    $region8: #{tpu_custom_call.1} parent=1 // loop_exit
      _
    %1212 = vsyncpa [#allocation4], 1
    %s1213 = scalar_lea.sflag [#allocation4], 1
    %1214 = vsyncpa %s1213, 1
    %1215 = vsyncpa [#allocation7], 1
    %1216 = vsyncpa [#allocation5], 1
    %s1217 = scalar_lea.sflag [#allocation5], 1
    %1218 = vsyncpa %s1217, 1
    %1219 = vsyncpa [#allocation11], 1
    %s1220 = scalar_lea.sflag [#allocation11], 1
    %1221 = vsyncpa %s1220, 1

</llo_original>
